<compile_context>
chip_gen: v7x
topology: tpu7x:2x2x1
jax: 0.10.0
libtpu: 0.0.40
codegen_flags: <defaults>
</compile_context>

<pallas_src>
import jax
import jax.numpy as jnp
from jax.experimental import pallas as pl
from jax.experimental.pallas import tpu as pltpu

KH = KW = 7
STRIDE = 2
PAD = 3
BN_EPS = 1e-5
LANE = 128  # pad channel dims to lane width


def _round_up(v, m):
    return (v + m - 1) // m * m


# ------------------------------ Pallas kernels ------------------------------

def _conv_stats_kernel(p_ref, w1_ref, stats_ref):
    """Pass 1: 7x7/s2 conv (block-diagonal weight == both branches) for one M-tile,
    accumulate per-channel sum and sum-of-squares (f32) for the BN batch stats."""
    @pl.when(pl.program_id(0) == 0)
    def _():
        stats_ref[...] = jnp.zeros_like(stats_ref)

    s = jnp.dot(p_ref[...], w1_ref[...],
                preferred_element_type=jnp.float32)              # (TM, Cp) f32
    stats_ref[0:1, :] = stats_ref[0:1, :] + jnp.sum(s, axis=0, keepdims=True)
    stats_ref[1:2, :] = stats_ref[1:2, :] + jnp.sum(s * s, axis=0, keepdims=True)


def _conv_bn_relu_proj_kernel(p_ref, w1_ref, scale_ref, bias_ref, w2_ref, out_ref):
    """Pass 2: recompute the conv tile, BN folded to one FMA, ReLU, 1x1 projection."""
    s = jnp.dot(p_ref[...], w1_ref[...],
                preferred_element_type=jnp.float32)              # (TM, Cp) f32
    y = jnp.maximum(s * scale_ref[...] + bias_ref[...], 0.0)     # BN + ReLU (f32)
    out_ref[...] = jnp.dot(y.astype(jnp.bfloat16), w2_ref[...],
                           preferred_element_type=jnp.float32).astype(out_ref.dtype)


# --------------------------------- wrapper -----------------------------------

def modified_conv_forward(x_nchw, w_conv, w_new, gamma, beta, w_proj, *, tile_m=2048):
    """x_nchw: (N,4,H,W); w_conv: (C1,3,7,7); w_new: (1,1,7,7);
    gamma/beta: (C1+1,); w_proj: (Cout, C1+1, 1, 1).  Returns (N, Cout, H//2, W//2)."""
    N, C, H, W = x_nchw.shape
    assert C == 4, "ModifiedConv expects 4 input channels (Split((3,1), dim=1))"
    C1 = w_conv.shape[0]
    Ccat = C1 + 1
    Cout = w_proj.shape[0]
    OH = (H + 2 * PAD - KH) // STRIDE + 1
    OW = (W + 2 * PAD - KW) // STRIDE + 1
    M = N * OH * OW
    K = KH * KW * C

    Kp = _round_up(K, LANE)           # 196 -> 256
    Cp = _round_up(Ccat, LANE)        # e.g. 9 / 65 -> 128
    Op = _round_up(Cout, LANE)        # e.g. 16 / 64 -> 128
    TM = min(tile_m, _round_up(M, 128))
    Mp = _round_up(M, TM)
    n_tiles = Mp // TM

    # ---- glue (XLA side): NCHW -> NHWC, pad, im2col, cast to bf16 -------------
    # TODO(synk): move patch extraction into the kernel (overlapping row slabs via
    # manual DMA) to remove the 49x im2col HBM amplification; bf16 halves it for now.
    x = jnp.transpose(x_nchw, (0, 2, 3, 1)).astype(jnp.float32)
    xp = jnp.pad(x, ((0, 0), (PAD, PAD), (PAD, PAD), (0, 0)))
    cols = []
    for kh in range(KH):
        for kw in range(KW):
            cols.append(xp[:, kh:kh + STRIDE * OH:STRIDE,
                           kw:kw + STRIDE * OW:STRIDE, :])        # (N, OH, OW, 4)
    patches = jnp.stack(cols, axis=3).reshape(M, K).astype(jnp.bfloat16)
    patches = jnp.pad(patches, ((0, Mp - M), (0, Kp - K)))        # padded rows are zero

    # Split(3,1) + Parallel(conv, new_conv) + Concat == ONE conv with block-diag weight.
    w_full = jnp.zeros((Ccat, C, KH, KW), jnp.float32)
    w_full = w_full.at[:C1, :3].set(w_conv.astype(jnp.float32))
    w_full = w_full.at[C1, 3].set(w_new[0, 0].astype(jnp.float32))
    # (co, c, kh, kw) -> flat K index ((kh*KW + kw)*C + c), matching im2col order
    w1 = jnp.transpose(w_full, (2, 3, 1, 0)).reshape(K, Ccat)
    w1 = jnp.pad(w1, ((0, Kp - K), (0, Cp - Ccat))).astype(jnp.bfloat16)

    # 1x1 projection weight (Cout, Ccat, 1, 1) -> (Ccat, Cout), padded
    w2 = jnp.transpose(w_proj[:, :, 0, 0], (1, 0)).astype(jnp.float32)
    w2 = jnp.pad(w2, ((0, Cp - Ccat), (0, Op - Cout))).astype(jnp.bfloat16)

    gamma_p = jnp.pad(gamma.astype(jnp.float32), (0, Cp - Ccat))
    beta_p = jnp.pad(beta.astype(jnp.float32), (0, Cp - Ccat))

    # ---- pass 1: conv + per-channel sum / sum-sq (output-resident accumulator) ----
    stats = pl.pallas_call(
        _conv_stats_kernel,
        out_shape=jax.ShapeDtypeStruct((8, Cp), jnp.float32),
        grid=(n_tiles,),
        in_specs=[
            pl.BlockSpec((TM, Kp), lambda i: (i, 0)),
            pl.BlockSpec((Kp, Cp), lambda i: (0, 0)),
        ],
        out_specs=pl.BlockSpec((8, Cp), lambda i: (0, 0)),
        compiler_params=pltpu.CompilerParams(dimension_semantics=("arbitrary",)),
    )(patches, w1)

    # Fold BN (training mode, biased variance) into a single per-channel FMA.
    # Zero-padded rows of `patches` contribute exactly 0 to both sums, so we divide
    # by the true M (not Mp) to get unbiased-by-padding batch statistics.
    mean = stats[0] / M
    var = jnp.maximum(stats[1] / M - mean * mean, 0.0)
    scale = (gamma_p * jax.lax.rsqrt(var + BN_EPS)).reshape(1, Cp)
    bias = (beta_p - mean * gamma_p * jax.lax.rsqrt(var + BN_EPS)).reshape(1, Cp)

    # ---- pass 2: recompute conv tile, BN FMA, ReLU, 1x1 projection -------------
    out_flat = pl.pallas_call(
        _conv_bn_relu_proj_kernel,
        out_shape=jax.ShapeDtypeStruct((Mp, Op), jnp.float32),
        grid=(n_tiles,),
        in_specs=[
            pl.BlockSpec((TM, Kp), lambda i: (i, 0)),
            pl.BlockSpec((Kp, Cp), lambda i: (0, 0)),
            pl.BlockSpec((1, Cp), lambda i: (0, 0)),
            pl.BlockSpec((1, Cp), lambda i: (0, 0)),
            pl.BlockSpec((Cp, Op), lambda i: (0, 0)),
        ],
        out_specs=pl.BlockSpec((TM, Op), lambda i: (i, 0)),
        compiler_params=pltpu.CompilerParams(dimension_semantics=("parallel",)),
    )(patches, w1, scale, bias, w2)

    out = out_flat[:M, :Cout].reshape(N, OH, OW, Cout)
    return jnp.transpose(out, (0, 3, 1, 2))  # back to NCHW


# ------------------------------ pure-JAX reference ---------------------------

def _reference(x_nchw, w_conv, w_new, gamma, beta, w_proj):
    x = jnp.transpose(x_nchw, (0, 2, 3, 1)).astype(jnp.float32)
    C1 = w_conv.shape[0]
    w_full = jnp.zeros((C1 + 1, 4, KH, KW), jnp.float32)
    w_full = w_full.at[:C1, :3].set(w_conv)
    w_full = w_full.at[C1, 3].set(w_new[0, 0])
    w_hwio = jnp.transpose(w_full, (2, 3, 1, 0))
    s = jax.lax.conv_general_dilated(
        x, w_hwio, (STRIDE, STRIDE), ((PAD, PAD), (PAD, PAD)),
        dimension_numbers=('NHWC', 'HWIO', 'NHWC'))
    mean = jnp.mean(s, axis=(0, 1, 2), keepdims=True)
    var = jnp.mean((s - mean) ** 2, axis=(0, 1, 2), keepdims=True)
    y = (s - mean) * jax.lax.rsqrt(var + BN_EPS) * gamma + beta
    y = jnp.maximum(y, 0.0)
    out = jnp.einsum('nhwc,oc->nhwo', y, w_proj[:, :, 0, 0])
    return jnp.transpose(out, (0, 3, 1, 2))


if __name__ == "__main__":
    key = jax.random.PRNGKey(0)
    k1, k2, k3, kx = jax.random.split(key, 4)

    N, H, W = 2, 16, 16
    C1 = 8      # conv.out_channels (small stand-in for ResNet's 64)
    Cout = 16   # ModifiedConv out_channels (small stand-in for 64)

    x = jax.random.normal(kx, (N, 4, H, W), jnp.float32)
    w_conv = jax.random.normal(k1, (C1, 3, 7, 7), jnp.float32) * 0.1      # conv weight (bias=False)
    w_new = jax.random.normal(k2, (1, 1, 7, 7), jnp.float32) * 0.1        # new_conv weight (bias=False)
    gamma = jnp.ones((C1 + 1,), jnp.float32)                              # BatchNorm2d affine init
    beta = jnp.zeros((C1 + 1,), jnp.float32)
    w_proj = jax.random.normal(k3, (Cout, C1 + 1, 1, 1), jnp.float32) * 0.1  # ConvProject (bias=False)

    out = modified_conv_forward(x, w_conv, w_new, gamma, beta, w_proj)
    out = jax.block_until_ready(out)

    assert out.shape == (N, Cout, H // 2, W // 2)
    ref = _reference(x, w_conv, w_new, gamma, beta, w_proj)
    # bf16 MXU matmuls -> compare against the f32 reference with bf16-appropriate tolerance.
    assert jnp.allclose(out, ref, atol=5e-2, rtol=5e-2), "mismatch vs pure-JAX reference"
    print("KERNEL_OK")
</pallas_src>

<mosaic_0001>
module attributes {stable_mosaic.version = 11 : i64} {
  func.func @_conv_stats_kernel(%arg0: i32, %arg1: memref<128x256xbf16, #tpu.memory_space<vmem>>, %arg2: memref<256x128xbf16, #tpu.memory_space<vmem>>, %arg3: memref<8x128xf32, #tpu.memory_space<vmem>>) attributes {dimension_semantics = [#tpu.dimension_semantics<arbitrary>], iteration_bounds = array<i64: 1>, scalar_prefetch = 0 : i64, scratch_operands = 0 : i64, tpu.core_type = #tpu.core_type<tc>, window_params = [{transform_indices = @transform_0, window_bounds = array<i64: 128, 256>}, {pipeline_mode = #tpu.pipeline_mode<synchronous>, transform_indices = @transform_1, window_bounds = array<i64: 256, 128>}, {pipeline_mode = #tpu.pipeline_mode<synchronous>, transform_indices = @transform_2, window_bounds = array<i64: 8, 128>}]} {
    %c0_i32 = arith.constant 0 : i32
    %0 = arith.cmpi eq, %arg0, %c0_i32 : i32
    %1 = arith.extui %0 : i1 to i32
    %c0_i32_0 = arith.constant 0 : i32
    %2 = arith.cmpi ne, %1, %c0_i32_0 : i32
    scf.if %2 {
      %cst_13 = arith.constant 0.000000e+00 : f32
      %17 = vector.broadcast %cst_13 : f32 to vector<8x128xf32>
      %c0_14 = arith.constant 0 : index
      %c0_15 = arith.constant 0 : index
      %18 = vector.load %arg3[%c0_14, %c0_15] : memref<8x128xf32, #tpu.memory_space<vmem>>, vector<8x128xf32>
      tpu.vector_store %arg3[%c0_14, %c0_15], %17 {strides = array<i32>} : memref<8x128xf32, #tpu.memory_space<vmem>>, vector<8x128xf32>,
    } else {
    }
    %c0 = arith.constant 0 : index
    %c0_1 = arith.constant 0 : index
    %3 = vector.load %arg1[%c0, %c0_1] : memref<128x256xbf16, #tpu.memory_space<vmem>>, vector<128x256xbf16>
    %c0_2 = arith.constant 0 : index
    %c0_3 = arith.constant 0 : index
    %4 = vector.load %arg2[%c0_2, %c0_3] : memref<256x128xbf16, #tpu.memory_space<vmem>>, vector<256x128xbf16>
    %cst = arith.constant dense<0.000000e+00> : vector<128x128xf32>
    %5 = tpu.matmul %3, %4, %cst {dimension_numbers = #tpu.dot_dimension_numbers<[1], [0], [0], [1], [0, 0, 1, 1], [], []>} : vector<128x256xbf16>, vector<256x128xbf16>, vector<128x128xf32> -> vector<128x128xf32>
    %c0_4 = arith.constant 0 : index
    %c0_5 = arith.constant 0 : index
    %6 = vector.load %arg3[%c0_4, %c0_5] : memref<8x128xf32, #tpu.memory_space<vmem>>, vector<1x128xf32>
    %cst_6 = arith.constant dense<0.000000e+00> : vector<128xf32>
    %7 = vector.multi_reduction <add>, %5, %cst_6 [0] : vector<128x128xf32> to vector<128xf32>
    %8 = vector.shape_cast %7 : vector<128xf32> to vector<1x128xf32>
    %9 = arith.addf %6, %8 : vector<1x128xf32>
    %c0_7 = arith.constant 0 : index
    %c0_8 = arith.constant 0 : index
    %10 = vector.load %arg3[%c0_7, %c0_8] : memref<8x128xf32, #tpu.memory_space<vmem>>, vector<1x128xf32>
    tpu.vector_store %arg3[%c0_7, %c0_8], %9 {strides = array<i32>} : memref<8x128xf32, #tpu.memory_space<vmem>>, vector<1x128xf32>,
    %c1 = arith.constant 1 : index
    %c0_9 = arith.constant 0 : index
    %11 = vector.load %arg3[%c1, %c0_9] : memref<8x128xf32, #tpu.memory_space<vmem>>, vector<1x128xf32>
    %12 = arith.mulf %5, %5 : vector<128x128xf32>
    %cst_10 = arith.constant dense<0.000000e+00> : vector<128xf32>
    %13 = vector.multi_reduction <add>, %12, %cst_10 [0] : vector<128x128xf32> to vector<128xf32>
    %14 = vector.shape_cast %13 : vector<128xf32> to vector<1x128xf32>
    %15 = arith.addf %11, %14 : vector<1x128xf32>
    %c1_11 = arith.constant 1 : index
    %c0_12 = arith.constant 0 : index
    %16 = vector.load %arg3[%c1_11, %c0_12] : memref<8x128xf32, #tpu.memory_space<vmem>>, vector<1x128xf32>
    tpu.vector_store %arg3[%c1_11, %c0_12], %15 {strides = array<i32>} : memref<8x128xf32, #tpu.memory_space<vmem>>, vector<1x128xf32>,
    return
  }
  func.func @transform_0(%arg0: i32) -> (i32, i32) {
    %c0_i32 = arith.constant 0 : i32
    %c0_i32_0 = arith.constant 0 : i32
    return %arg0, %c0_i32 : i32, i32
  }
  func.func @transform_1(%arg0: i32) -> (i32, i32) {
    %c0_i32 = arith.constant 0 : i32
    %c0_i32_0 = arith.constant 0 : i32
    %c0_i32_1 = arith.constant 0 : i32
    return %c0_i32, %c0_i32_0 : i32, i32
  }
  func.func @transform_2(%arg0: i32) -> (i32, i32) {
    %c0_i32 = arith.constant 0 : i32
    %c0_i32_0 = arith.constant 0 : i32
    %c0_i32_1 = arith.constant 0 : i32
    return %c0_i32, %c0_i32_0 : i32, i32
  }
}

</mosaic_0001>

<llo_original>
// kernel: tpu_custom_call.1
$region0: #{tpu_custom_call.1}
  #allocation0 [shape = 'u32[]', space=smem, size = 0x4, offset = 0x4, fixed_abs, tag = 'smem constant byte address 0x4 - core index']
  #allocation1 [shape = 'u32[144,128]{1,0:T(1,128)}', space=vmem, size = 0x12000, scoped, tag = 'internal scratch']
  %s0 = inlined_call_operand.hbm [shape: bf16[128,256], index: 0, kind: input, shape index: {}]
  %s1 = inlined_call_operand.hbm [shape: bf16[256,128], index: 1, kind: input, shape index: {}]
  %s2 = inlined_call_operand.hbm [shape: f32[8,128], index: 2, kind: output, shape index: {}]
  %s3 = sld [smem:[#allocation0]]
  $region30: #{tpu_custom_call.1} parent=0
    _
  %s5 = ssub.s32 1, %s3
  %s6 = scalar_select 0, %s5, %s3
  $region1: #{tpu_custom_call.1} parent=0
    #allocation2 [shape = 'u8[65536]{0}', space=vmem, size = 0x10000, scoped, tag = 'input window, operand 0, single buffered']
    #allocation3 [shape = 's32[1]{0}', space=sflag, size = 0x4, scoped, tag = 'scoped memory for tpu_custom_call.1']
    #allocation4 [shape = 's32[1]{0}', space=sflag, size = 0x4, scoped, tag = 'scoped memory for tpu_custom_call.1']
    #allocation5 [shape = 'u8[65536]{0}', space=vmem, size = 0x10000, scoped, tag = 'input window, operand 1, single buffered']
    #allocation6 [shape = 's32[1]{0}', space=sflag, size = 0x4, scoped, tag = 'scoped memory for tpu_custom_call.1']
    #allocation7 [shape = 'u8[4096]{0}', space=vmem, size = 0x1000, scoped, tag = 'output window, operand 0, single buffered']
    %7 = vsyncpa [#allocation3], 0
    %8 = vsyncpa [#allocation6], 0
    %9 = vsyncpa [#allocation4], 0
    // Predicated region
    $region2: #{tpu_custom_call.1} parent=1 // pred_check
      _
    $region3: #{tpu_custom_call.1} parent=1 // pred_check_branch
      %11 = sbr.rel (0) target = $region5
    $region4: #{tpu_custom_call.1} parent=1 // pred_region
      %s13 = ssub.s32 2048, 2048
      %14 = vsyncadd [#allocation3], %s13
      %s15 = sshll.u32 [#allocation2], 4
      %s16 = int_to_ptr.vmem [resolvable:$true] %s15
      %21 = dma.hbm_to_vmem [thread:$0]  %s0, 2048, %s16, [#allocation3], 128, 128, 8
    $region5: #{tpu_custom_call.1} parent=1 // pred_fallthru
      _
    // Predicated region
    $region6: #{tpu_custom_call.1} parent=1 // pred_check
      _
    $region7: #{tpu_custom_call.1} parent=1 // pred_check_branch
      %23 = sbr.rel (0) target = $region9
    $region8: #{tpu_custom_call.1} parent=1 // pred_region
      %s25 = ssub.s32 2048, 2048
      %26 = vsyncadd [#allocation6], %s25
      %s27 = sshll.u32 [#allocation5], 4
      %s28 = int_to_ptr.vmem [resolvable:$true] %s27
      %33 = dma.hbm_to_vmem [thread:$0]  %s1, 2048, %s28, [#allocation6], 64, 64, 4
    $region9: #{tpu_custom_call.1} parent=1 // pred_fallthru
      _
    // Predicated region
    $region10: #{tpu_custom_call.1} parent=1 // pred_check
      _
    $region11: #{tpu_custom_call.1} parent=1 // pred_check_branch
      %35 = sbr.rel (0) target = $region13
    $region12: #{tpu_custom_call.1} parent=1 // pred_region
      %36 = dma.done [#allocation3], 2048
    $region13: #{tpu_custom_call.1} parent=1 // pred_fallthru
      _
    // Predicated region
    $region14: #{tpu_custom_call.1} parent=1 // pred_check
      _
    $region15: #{tpu_custom_call.1} parent=1 // pred_check_branch
      %38 = sbr.rel (0) target = $region17
    $region16: #{tpu_custom_call.1} parent=1 // pred_region
      %39 = dma.done [#allocation6], 2048
    $region17: #{tpu_custom_call.1} parent=1 // pred_fallthru
      _
    %p41 = scmp.eq.s32.totalorder 0, 0
    // Predicated region
    $region18: #{tpu_custom_call.1} parent=1 // pred_check
      %p42 = pneg %p41
    $region19: #{tpu_custom_call.1} parent=1 // pred_check_branch
      %44 = sbr.rel (%p42) target = $region21
    $region20: #{tpu_custom_call.1} parent=1 // pred_region
      %45 = vst [vmem:[#allocation7] sm:$0xff] 0.0
    $region21: #{tpu_custom_call.1} parent=1 // pred_fallthru
      _
    %v46 = vld [vmem:[#allocation2] sm:$0xff]
    %v47 = vld [vmem:[#allocation2 + $0x8] sm:$0xff]
    %v48 = vld [vmem:[#allocation2 + $0x10] sm:$0xff]
    %v49 = vld [vmem:[#allocation2 + $0x18] sm:$0xff]
    %v50 = vld [vmem:[#allocation2 + $0x20] sm:$0xff]
    %v51 = vld [vmem:[#allocation2 + $0x28] sm:$0xff]
    %v52 = vld [vmem:[#allocation2 + $0x30] sm:$0xff]
    %v53 = vld [vmem:[#allocation2 + $0x38] sm:$0xff]
    %v54 = vld [vmem:[#allocation2 + $0x40] sm:$0xff]
    %v55 = vld [vmem:[#allocation2 + $0x48] sm:$0xff]
    %v56 = vld [vmem:[#allocation2 + $0x50] sm:$0xff]
    %v57 = vld [vmem:[#allocation2 + $0x58] sm:$0xff]
    %v58 = vld [vmem:[#allocation2 + $0x60] sm:$0xff]
    %v59 = vld [vmem:[#allocation2 + $0x68] sm:$0xff]
    %v60 = vld [vmem:[#allocation2 + $0x70] sm:$0xff]
    %v61 = vld [vmem:[#allocation2 + $0x78] sm:$0xff]
    %v62 = vld [vmem:[#allocation5] sm:$0xf]
    %v63 = vld [vmem:[#allocation5 + $0x4] sm:$0xf]
    %v64 = vld [vmem:[#allocation5 + $0x8] sm:$0xf]
    %v65 = vld [vmem:[#allocation5 + $0xc] sm:$0xf]
    %v66 = vld [vmem:[#allocation5 + $0x10] sm:$0xf]
    %v67 = vld [vmem:[#allocation5 + $0x14] sm:$0xf]
    %v68 = vld [vmem:[#allocation5 + $0x18] sm:$0xf]
    %v69 = vld [vmem:[#allocation5 + $0x1c] sm:$0xf]
    %v70 = vld [vmem:[#allocation5 + $0x20] sm:$0xf]
    %v71 = vld [vmem:[#allocation5 + $0x24] sm:$0xf]
    %v72 = vld [vmem:[#allocation5 + $0x28] sm:$0xf]
    %v73 = vld [vmem:[#allocation5 + $0x2c] sm:$0xf]
    %v74 = vld [vmem:[#allocation5 + $0x30] sm:$0xf]
    %v75 = vld [vmem:[#allocation5 + $0x34] sm:$0xf]
    %v76 = vld [vmem:[#allocation5 + $0x38] sm:$0xf]
    %v77 = vld [vmem:[#allocation5 + $0x3c] sm:$0xf]
    %v78 = vld [vmem:[#allocation5 + $0x40] sm:$0xf]
    %v79 = vld [vmem:[#allocation5 + $0x44] sm:$0xf]
    %v80 = vld [vmem:[#allocation5 + $0x48] sm:$0xf]
    %v81 = vld [vmem:[#allocation5 + $0x4c] sm:$0xf]
    %v82 = vld [vmem:[#allocation5 + $0x50] sm:$0xf]
    %v83 = vld [vmem:[#allocation5 + $0x54] sm:$0xf]
    %v84 = vld [vmem:[#allocation5 + $0x58] sm:$0xf]
    %v85 = vld [vmem:[#allocation5 + $0x5c] sm:$0xf]
    %v86 = vld [vmem:[#allocation5 + $0x60] sm:$0xf]
    %v87 = vld [vmem:[#allocation5 + $0x64] sm:$0xf]
    %v88 = vld [vmem:[#allocation5 + $0x68] sm:$0xf]
    %v89 = vld [vmem:[#allocation5 + $0x6c] sm:$0xf]
    %v90 = vld [vmem:[#allocation5 + $0x70] sm:$0xf]
    %v91 = vld [vmem:[#allocation5 + $0x74] sm:$0xf]
    %v92 = vld [vmem:[#allocation5 + $0x78] sm:$0xf]
    %v93 = vld [vmem:[#allocation5 + $0x7c] sm:$0xf]
    %v110 = vunpack.c.l.b16 %v46
    %v111 = vunpack.c.h.b16 %v46
    %v112 = vunpack.c.l.b16 %v47
    %v113 = vunpack.c.h.b16 %v47
    %v114 = vunpack.c.l.b16 %v48
    %v115 = vunpack.c.h.b16 %v48
    %v116 = vunpack.c.l.b16 %v49
    %v117 = vunpack.c.h.b16 %v49
    %v118 = vunpack.c.l.b16 %v50
    %v119 = vunpack.c.h.b16 %v50
    %v120 = vunpack.c.l.b16 %v51
    %v121 = vunpack.c.h.b16 %v51
    %v122 = vunpack.c.l.b16 %v52
    %v123 = vunpack.c.h.b16 %v52
    %v124 = vunpack.c.l.b16 %v53
    %v125 = vunpack.c.h.b16 %v53
    %v126 = vunpack.c.l.b16 %v54
    %v127 = vunpack.c.h.b16 %v54
    %v128 = vunpack.c.l.b16 %v55
    %v129 = vunpack.c.h.b16 %v55
    %v130 = vunpack.c.l.b16 %v56
    %v131 = vunpack.c.h.b16 %v56
    %v132 = vunpack.c.l.b16 %v57
    %v133 = vunpack.c.h.b16 %v57
    %v134 = vunpack.c.l.b16 %v58
    %v135 = vunpack.c.h.b16 %v58
    %v136 = vunpack.c.l.b16 %v59
    %v137 = vunpack.c.h.b16 %v59
    %v138 = vunpack.c.l.b16 %v60
    %v139 = vunpack.c.h.b16 %v60
    %v140 = vunpack.c.l.b16 %v61
    %v141 = vunpack.c.h.b16 %v61
    %v142 = vpack.c.b16 %v112, %v110
    %v143 = vpack.c.b16 %v113, %v111
    %v144 = vpack.c.b16 %v116, %v114
    %v145 = vpack.c.b16 %v117, %v115
    %v146 = vpack.c.b16 %v120, %v118
    %v147 = vpack.c.b16 %v121, %v119
    %v148 = vpack.c.b16 %v124, %v122
    %v149 = vpack.c.b16 %v125, %v123
    %v150 = vpack.c.b16 %v128, %v126
    %v151 = vpack.c.b16 %v129, %v127
    %v152 = vpack.c.b16 %v132, %v130
    %v153 = vpack.c.b16 %v133, %v131
    %v154 = vpack.c.b16 %v136, %v134
    %v155 = vpack.c.b16 %v137, %v135
    %v156 = vpack.c.b16 %v140, %v138
    %v157 = vpack.c.b16 %v141, %v139
    %v206 = vunpack.c.l.b16 %v62
    %v207 = vunpack.c.l.b16 %v63
    %v208 = vunpack.c.l.b16 %v64
    %v209 = vunpack.c.l.b16 %v65
    %v210 = vunpack.c.l.b16 %v66
    %v211 = vunpack.c.l.b16 %v67
    %v212 = vunpack.c.l.b16 %v68
    %v213 = vunpack.c.l.b16 %v69
    %v214 = vunpack.c.l.b16 %v70
    %v215 = vunpack.c.l.b16 %v71
    %v216 = vunpack.c.l.b16 %v72
    %v217 = vunpack.c.l.b16 %v73
    %v218 = vunpack.c.l.b16 %v74
    %v219 = vunpack.c.l.b16 %v75
    %v220 = vunpack.c.l.b16 %v76
    %v221 = vunpack.c.l.b16 %v77
    %v222 = vunpack.c.l.b16 %v78
    %v223 = vunpack.c.l.b16 %v79
    %v224 = vunpack.c.l.b16 %v80
    %v225 = vunpack.c.l.b16 %v81
    %v226 = vunpack.c.l.b16 %v82
    %v227 = vunpack.c.l.b16 %v83
    %v228 = vunpack.c.l.b16 %v84
    %v229 = vunpack.c.l.b16 %v85
    %v230 = vunpack.c.l.b16 %v86
    %v231 = vunpack.c.l.b16 %v87
    %v232 = vunpack.c.l.b16 %v88
    %v233 = vunpack.c.l.b16 %v89
    %v234 = vunpack.c.l.b16 %v90
    %v235 = vunpack.c.l.b16 %v91
    %v236 = vunpack.c.l.b16 %v92
    %v237 = vunpack.c.l.b16 %v93
    %v238 = vpack.c.b16 %v207, %v206
    %v239 = vpack.c.b16 %v209, %v208
    %v240 = vpack.c.b16 %v211, %v210
    %v241 = vpack.c.b16 %v213, %v212
    %v242 = vpack.c.b16 %v215, %v214
    %v243 = vpack.c.b16 %v217, %v216
    %v244 = vpack.c.b16 %v219, %v218
    %v245 = vpack.c.b16 %v221, %v220
    %v246 = vpack.c.b16 %v223, %v222
    %v247 = vpack.c.b16 %v225, %v224
    %v248 = vpack.c.b16 %v227, %v226
    %v249 = vpack.c.b16 %v229, %v228
    %v250 = vpack.c.b16 %v231, %v230
    %v251 = vpack.c.b16 %v233, %v232
    %v252 = vpack.c.b16 %v235, %v234
    %v253 = vpack.c.b16 %v237, %v236
    %270 = vmatprep.subr.bf16.mxu0 0
    %271 = vmatpush1.bf16.msra.mxu0 %v238
    %272 = vmatprep.subr.bf16.mxu0 0
    %273 = vmatpush1.bf16.msra.mxu0 %v239
    %274 = vmatprep.subr.bf16.mxu0 0
    %275 = vmatpush1.bf16.msra.mxu0 %v240
    %276 = vmatprep.subr.bf16.mxu0 0
    %277 = vmatpush1.bf16.msra.mxu0 %v241
    %278 = vmatprep.subr.bf16.mxu0 0
    %279 = vmatpush1.bf16.msra.mxu0 %v242
    %280 = vmatprep.subr.bf16.mxu0 0
    %281 = vmatpush1.bf16.msra.mxu0 %v243
    %282 = vmatprep.subr.bf16.mxu0 0
    %283 = vmatpush1.bf16.msra.mxu0 %v244
    %284 = vmatprep.subr.bf16.mxu0 0
    %285 = vmatpush1.bf16.msra.mxu0 %v245
    %286 = vmatprep.subr.bf16.mxu0 0
    %287 = vmatpush1.bf16.msra.mxu0 %v246
    %288 = vmatprep.subr.bf16.mxu0 0
    %289 = vmatpush1.bf16.msra.mxu0 %v247
    %290 = vmatprep.subr.bf16.mxu0 0
    %291 = vmatpush1.bf16.msra.mxu0 %v248
    %292 = vmatprep.subr.bf16.mxu0 0
    %293 = vmatpush1.bf16.msra.mxu0 %v249
    %294 = vmatprep.subr.bf16.mxu0 0
    %295 = vmatpush1.bf16.msra.mxu0 %v250
    %296 = vmatprep.subr.bf16.mxu0 0
    %297 = vmatpush1.bf16.msra.mxu0 %v251
    %298 = vmatprep.subr.bf16.mxu0 0
    %299 = vmatpush1.bf16.msra.mxu0 %v252
    %300 = vmatprep.subr.bf16.mxu0 0
    %301 = vmatpush1.bf16.msra.mxu0 %v253
    %302 = vmatprep.mubr.bf16.mxu0 %v143
    %303 = vmatmul.mubr.bf16.gmra.mrb[0].mxu0 %v142
    %v304 = vpop.f32.mrb[0].mxu0
    %v305 = vadd.f32 0.0, %v304
    %v306 = vpop.f32.mrb[0].mxu0
    %v307 = vpop.f32.mrb[0].mxu0
    %v308 = vadd.f32 0.0, %v307
    %v309 = vpop.f32.mrb[0].mxu0
    %310 = vmatprep.mubr.bf16.mxu0 %v145
    %311 = vmatmul.mubr.bf16.gmra.mrb[0].mxu0 %v144
    %v312 = vpop.f32.mrb[0].mxu0
    %v313 = vadd.f32 0.0, %v312
    %v314 = vpop.f32.mrb[0].mxu0
    %v315 = vpop.f32.mrb[0].mxu0
    %v316 = vadd.f32 0.0, %v315
    %v317 = vpop.f32.mrb[0].mxu0
    %318 = vmatprep.mubr.bf16.mxu0 %v147
    %319 = vmatmul.mubr.bf16.gmra.mrb[0].mxu0 %v146
    %v320 = vpop.f32.mrb[0].mxu0
    %v321 = vadd.f32 0.0, %v320
    %v322 = vpop.f32.mrb[0].mxu0
    %v323 = vpop.f32.mrb[0].mxu0
    %v324 = vadd.f32 0.0, %v323
    %v325 = vpop.f32.mrb[0].mxu0
    %326 = vmatprep.mubr.bf16.mxu0 %v149
    %327 = vmatmul.mubr.bf16.gmra.mrb[0].mxu0 %v148
    %v328 = vpop.f32.mrb[0].mxu0
    %v329 = vadd.f32 0.0, %v328
    %v330 = vpop.f32.mrb[0].mxu0
    %v331 = vpop.f32.mrb[0].mxu0
    %v332 = vadd.f32 0.0, %v331
    %v333 = vpop.f32.mrb[0].mxu0
    %334 = vmatprep.mubr.bf16.mxu0 %v151
    %335 = vmatmul.mubr.bf16.gmra.mrb[0].mxu0 %v150
    %v336 = vpop.f32.mrb[0].mxu0
    %v337 = vadd.f32 0.0, %v336
    %v338 = vpop.f32.mrb[0].mxu0
    %v339 = vpop.f32.mrb[0].mxu0
    %v340 = vadd.f32 0.0, %v339
    %v341 = vpop.f32.mrb[0].mxu0
    %342 = vmatprep.mubr.bf16.mxu0 %v153
    %343 = vmatmul.mubr.bf16.gmra.mrb[0].mxu0 %v152
    %v344 = vpop.f32.mrb[0].mxu0
    %v345 = vadd.f32 0.0, %v344
    %v346 = vpop.f32.mrb[0].mxu0
    %v347 = vpop.f32.mrb[0].mxu0
    %v348 = vadd.f32 0.0, %v347
    %v349 = vpop.f32.mrb[0].mxu0
    %350 = vmatprep.mubr.bf16.mxu0 %v155
    %351 = vmatmul.mubr.bf16.gmra.mrb[0].mxu0 %v154
    %v352 = vpop.f32.mrb[0].mxu0
    %v353 = vadd.f32 0.0, %v352
    %v354 = vpop.f32.mrb[0].mxu0
    %v355 = vpop.f32.mrb[0].mxu0
    %v356 = vadd.f32 0.0, %v355
    %v357 = vpop.f32.mrb[0].mxu0
    %358 = vmatprep.mubr.bf16.mxu0 %v157
    %359 = vmatmul.mubr.bf16.gmra.mrb[0].mxu0 %v156
    %v360 = vpop.f32.mrb[0].mxu0
    %v361 = vadd.f32 0.0, %v360
    %v362 = vpop.f32.mrb[0].mxu0
    %v363 = vpop.f32.mrb[0].mxu0
    %v364 = vadd.f32 0.0, %v363
    %v365 = vpop.f32.mrb[0].mxu0
    %366 = vdwg.mxu0
    %v367 = vld [vmem:[#allocation7] sm:$0x1]
    %v368 = vadd.f32 %v305, %v308
    %v369 = vadd.f32 %v368, %v313
    %v370 = vadd.f32 %v369, %v316
    %v371 = vadd.f32 %v370, %v321
    %v372 = vadd.f32 %v371, %v324
    %v373 = vadd.f32 %v372, %v329
    %v374 = vadd.f32 %v373, %v332
    %v375 = vadd.f32 %v374, %v337
    %v376 = vadd.f32 %v375, %v340
    %v377 = vadd.f32 %v376, %v345
    %v378 = vadd.f32 %v377, %v348
    %v379 = vadd.f32 %v378, %v353
    %v380 = vadd.f32 %v379, %v356
    %v381 = vadd.f32 %v380, %v361
    %v382 = vadd.f32 %v381, %v364
    %v383 = vrot.slane %v382, 4
    %v384 = vadd.f32 %v382, %v383
    %v385 = vrot.slane %v384, 2
    %v386 = vadd.f32 %v384, %v385
    %v387 = vrot.slane %v386, 1
    %v388 = vadd.f32 %v386, %v387
    %v389 = vadd.f32 %v367, %v388
    %390 = vst [vmem:[#allocation7] sm:$0x1] %v389
    %v391 = vld [vmem:[#allocation7 + $0x1] sm:$0x1]
    %v392 = vmul.f32 %v305, %v305
    %v393 = vmul.f32 %v308, %v308
    %v394 = vmul.f32 %v313, %v313
    %v395 = vmul.f32 %v316, %v316
    %v396 = vmul.f32 %v321, %v321
    %v397 = vmul.f32 %v324, %v324
    %v398 = vmul.f32 %v329, %v329
    %v399 = vmul.f32 %v332, %v332
    %v400 = vmul.f32 %v337, %v337
    %v401 = vmul.f32 %v340, %v340
    %v402 = vmul.f32 %v345, %v345
    %v403 = vmul.f32 %v348, %v348
    %v404 = vmul.f32 %v353, %v353
    %v405 = vmul.f32 %v356, %v356
    %v406 = vmul.f32 %v361, %v361
    %v407 = vmul.f32 %v364, %v364
    %v408 = vadd.f32 %v392, %v393
    %v409 = vadd.f32 %v408, %v394
    %v410 = vadd.f32 %v409, %v395
    %v411 = vadd.f32 %v410, %v396
    %v412 = vadd.f32 %v411, %v397
    %v413 = vadd.f32 %v412, %v398
    %v414 = vadd.f32 %v413, %v399
    %v415 = vadd.f32 %v414, %v400
    %v416 = vadd.f32 %v415, %v401
    %v417 = vadd.f32 %v416, %v402
    %v418 = vadd.f32 %v417, %v403
    %v419 = vadd.f32 %v418, %v404
    %v420 = vadd.f32 %v419, %v405
    %v421 = vadd.f32 %v420, %v406
    %v422 = vadd.f32 %v421, %v407
    %v423 = vrot.slane %v422, 4
    %v424 = vadd.f32 %v422, %v423
    %v425 = vrot.slane %v424, 2
    %v426 = vadd.f32 %v424, %v425
    %v427 = vrot.slane %v426, 1
    %v428 = vadd.f32 %v426, %v427
    %v429 = vadd.f32 %v391, %v428
    %430 = vst [vmem:[#allocation7 + $0x1] sm:$0x1] %v429
    // Predicated region
    $region22: #{tpu_custom_call.1} parent=1 // pred_check
      _
    $region23: #{tpu_custom_call.1} parent=1 // pred_check_branch
      %432 = sbr.rel (0) target = $region25
    $region24: #{tpu_custom_call.1} parent=1 // pred_region
      %s434 = ssub.s32 128, 128
      %435 = vsyncadd [#allocation4], %s434
      %s437 = sshll.u32 [#allocation7], 4
      %s438 = int_to_ptr.vmem [resolvable:$true] %s437
      %440 = dma.vmem_to_hbm [thread:$0]  %s438, 128, %s2, [#allocation4]
    $region25: #{tpu_custom_call.1} parent=1 // pred_fallthru
      _
    // Predicated region
    $region26: #{tpu_custom_call.1} parent=1 // pred_check
      _
    $region27: #{tpu_custom_call.1} parent=1 // pred_check_branch
      %442 = sbr.rel (0) target = $region29
    $region28: #{tpu_custom_call.1} parent=1 // pred_region
      %443 = dma.done [#allocation4], 128
    $region29: #{tpu_custom_call.1} parent=1 // pred_fallthru
      _
    %444 = vsyncpa [#allocation3], 1
    %445 = vsyncpa [#allocation6], 1
    %446 = vsyncpa [#allocation4], 1

</llo_original>
